<compile_context>
chip_gen: v6e
topology: v6e:2x2x1
jax: 0.10.0
libtpu: 0.0.40
codegen_flags: <defaults>
</compile_context>

<pallas_src>
import jax
import jax.numpy as jnp
from jax.experimental import pallas as pl
from jax.experimental.pallas import tpu as pltpu

_LANE = 128     # lane width (last dim)
_SUBLANE = 8    # sublane width (second-to-last dim, f32)


def _round_up(x, m):
    return ((x + m - 1) // m) * m


def _mlp_kernel(x_ref, w1_ref, b1_ref, w2_ref, b2_ref, o_ref):
    # Cast the activation tile in-register (x stays in its own dtype in HBM).
    x = x_ref[...].astype(w1_ref.dtype)
    h = jnp.dot(x, w1_ref[...], preferred_element_type=jnp.float32) + b1_ref[...]
    h = jnp.maximum(h, 0.0)
    y = jnp.dot(h.astype(w2_ref.dtype), w2_ref[...],
                preferred_element_type=jnp.float32) + b2_ref[...]
    o_ref[...] = y.astype(o_ref.dtype)


def _pack_params(w1, b1, w2, b2, compute_dtype):
    """Cast weights to the compute dtype; pad only the hidden dim to 128."""
    K, H = w1.shape
    N = w2.shape[1]
    Hp = _round_up(H, _LANE)
    w1_p = jnp.zeros((K, Hp), compute_dtype).at[:, :H].set(w1.astype(compute_dtype))
    b1_p = jnp.zeros((1, Hp), jnp.float32).at[0, :H].set(b1.astype(jnp.float32))
    w2_p = jnp.zeros((Hp, N), compute_dtype).at[:H, :].set(w2.astype(compute_dtype))
    b2_p = jnp.reshape(b2, (1, N)).astype(jnp.float32)
    return w1_p, b1_p, w2_p, b2_p


def linear_qnet_forward(x, w1, b1, w2, b2, *, batch_block=1024,
                        compute_dtype=jnp.bfloat16):
    """x: [B, in], w1: [in, H], b1: [H], w2: [H, out], b2: [out] -> [B, out]."""
    B, K = x.shape
    N = w2.shape[1]
    out_dtype = x.dtype

    w1_p, b1_p, w2_p, b2_p = _pack_params(w1, b1, w2, b2, compute_dtype)
    Hp = w1_p.shape[1]

    # Adaptive batch tile: large enough to amortize per-step overhead, but not
    # grossly over-padding awkward batch sizes; sublane aligned.  Ragged
    # boundary blocks are masked by Pallas, so x / output need no padding.
    n_blocks = max(1, pl.cdiv(B, batch_block))
    tB = _round_up(pl.cdiv(B, n_blocks), _SUBLANE)
    grid = (pl.cdiv(B, tB),)

    w_itemsize = jnp.dtype(compute_dtype).itemsize
    cost = pl.CostEstimate(
        flops=2 * B * K * Hp + 2 * B * Hp * N,
        transcendentals=0,
        bytes_accessed=(B * K * jnp.dtype(x.dtype).itemsize          # x read
                        + (K * Hp + Hp * N) * w_itemsize             # weights
                        + (Hp + N) * 4                               # biases
                        + B * N * jnp.dtype(out_dtype).itemsize),    # output
    )

    # Weights/biases use a constant index_map -> they stay resident in VMEM
    # across batch blocks; only x tiles and output tiles stream through HBM.
    return pl.pallas_call(
        _mlp_kernel,
        out_shape=jax.ShapeDtypeStruct((B, N), out_dtype),
        grid=grid,
        in_specs=[
            pl.BlockSpec((tB, K), lambda i: (i, 0)),   # x: streamed, unpadded K
            pl.BlockSpec((K, Hp), lambda i: (0, 0)),   # w1: resident
            pl.BlockSpec((1, Hp), lambda i: (0, 0)),   # b1: resident
            pl.BlockSpec((Hp, N), lambda i: (0, 0)),   # w2: resident
            pl.BlockSpec((1, N), lambda i: (0, 0)),    # b2: resident
        ],
        out_specs=pl.BlockSpec((tB, N), lambda i: (i, 0)),  # narrow direct output
        compiler_params=pltpu.CompilerParams(
            dimension_semantics=("parallel",)),
        cost_estimate=cost,
    )(x, w1_p, b1_p, w2_p, b2_p)


def init_params(key, input_size, hidden_size, output_size, dtype=jnp.float32):
    # Mimics nn.Linear default init: U(-1/sqrt(fan_in), 1/sqrt(fan_in)).
    k1, k2, k3, k4 = jax.random.split(key, 4)
    bound1 = 1.0 / (input_size ** 0.5)
    bound2 = 1.0 / (hidden_size ** 0.5)
    w1 = jax.random.uniform(k1, (input_size, hidden_size), dtype, -bound1, bound1)
    b1 = jax.random.uniform(k2, (hidden_size,), dtype, -bound1, bound1)
    w2 = jax.random.uniform(k3, (hidden_size, output_size), dtype, -bound2, bound2)
    b2 = jax.random.uniform(k4, (output_size,), dtype, -bound2, bound2)
    return w1, b1, w2, b2


def _reference(x, w1, b1, w2, b2):
    return jnp.maximum(x @ w1 + b1, 0.0) @ w2 + b2


if __name__ == "__main__":
    # TODO(synk): Module's .save() (torch checkpoint I/O) is host-side and has
    # no kernel equivalent; not implemented.
    input_size, hidden_size, output_size = 11, 32, 3

    key = jax.random.PRNGKey(0)
    kx, kp, kx2 = jax.random.split(key, 3)
    w1, b1, w2, b2 = init_params(kp, input_size, hidden_size, output_size)

    # 1) Tiny batch, f32 compute: single-block grid, bit-tight check.
    x = jax.random.normal(kx, (2, input_size), jnp.float32)
    out = linear_qnet_forward(x, w1, b1, w2, b2, compute_dtype=jnp.float32)
    jax.block_until_ready(out)
    ref = _reference(x, w1, b1, w2, b2)
    assert out.shape == (2, output_size)
    assert jnp.allclose(out, ref, atol=1e-5, rtol=1e-5), "f32 small-batch mismatch"

    # 2) Batch not divisible by the tile, multi-block grid (forced small
    #    batch_block), f32 compute: exercises ragged boundary masking.
    xb = jax.random.normal(kx2, (300, input_size), jnp.float32)
    out_b = linear_qnet_forward(xb, w1, b1, w2, b2, batch_block=128,
                                compute_dtype=jnp.float32)
    jax.block_until_ready(out_b)
    ref_b = _reference(xb, w1, b1, w2, b2)
    assert out_b.shape == (300, output_size)
    assert jnp.allclose(out_b, ref_b, atol=1e-5, rtol=1e-5), "f32 ragged-grid mismatch"

    # 3) Default bf16 compute path (halved weight bytes, bf16 MXU), looser tol.
    out_bf = linear_qnet_forward(xb, w1, b1, w2, b2)
    jax.block_until_ready(out_bf)
    assert out_bf.shape == (300, output_size)
    assert jnp.allclose(out_bf, ref_b, atol=5e-2, rtol=5e-2), "bf16 mismatch"

    print("KERNEL_OK")
</pallas_src>

<mosaic_0001>
module attributes {stable_mosaic.version = 11 : i64} {
  func.func @_mlp_kernel(%arg0: i32, %arg1: memref<8x11xf32, #tpu.memory_space<vmem>>, %arg2: memref<11x128xf32, #tpu.memory_space<vmem>>, %arg3: memref<1x128xf32, #tpu.memory_space<vmem>>, %arg4: memref<128x3xf32, #tpu.memory_space<vmem>>, %arg5: memref<1x3xf32, #tpu.memory_space<vmem>>, %arg6: memref<8x3xf32, #tpu.memory_space<vmem>>) attributes {dimension_semantics = [#tpu.dimension_semantics<parallel>], iteration_bounds = array<i64: 1>, scalar_prefetch = 0 : i64, scratch_operands = 0 : i64, tpu.core_type = #tpu.core_type<tc>, window_params = [{transform_indices = @transform_0, window_bounds = array<i64: 8, 11>}, {pipeline_mode = #tpu.pipeline_mode<synchronous>, transform_indices = @transform_1, window_bounds = array<i64: 11, 128>}, {pipeline_mode = #tpu.pipeline_mode<synchronous>, transform_indices = @transform_2, window_bounds = array<i64: 1, 128>}, {pipeline_mode = #tpu.pipeline_mode<synchronous>, transform_indices = @transform_3, window_bounds = array<i64: 128, 3>}, {pipeline_mode = #tpu.pipeline_mode<synchronous>, transform_indices = @transform_4, window_bounds = array<i64: 1, 3>}, {transform_indices = @transform_5, window_bounds = array<i64: 8, 3>}]} {
    %c0 = arith.constant 0 : index
    %c0_0 = arith.constant 0 : index
    %0 = vector.load %arg1[%c0, %c0_0] : memref<8x11xf32, #tpu.memory_space<vmem>>, vector<8x11xf32>
    %c0_1 = arith.constant 0 : index
    %c0_2 = arith.constant 0 : index
    %1 = vector.load %arg2[%c0_1, %c0_2] : memref<11x128xf32, #tpu.memory_space<vmem>>, vector<11x128xf32>
    %cst = arith.constant dense<0.000000e+00> : vector<8x128xf32>
    %2 = tpu.matmul %0, %1, %cst {dimension_numbers = #tpu.dot_dimension_numbers<[1], [0], [0], [1], [0, 0, 1, 1], [], []>} : vector<8x11xf32>, vector<11x128xf32>, vector<8x128xf32> -> vector<8x128xf32>
    %c0_3 = arith.constant 0 : index
    %c0_4 = arith.constant 0 : index
    %3 = vector.load %arg3[%c0_3, %c0_4] : memref<1x128xf32, #tpu.memory_space<vmem>>, vector<1x128xf32>
    %4 = vector.broadcast %3 : vector<1x128xf32> to vector<8x128xf32>
    %5 = arith.addf %2, %4 : vector<8x128xf32>
    %cst_5 = arith.constant 0.000000e+00 : f32
    %6 = vector.broadcast %cst_5 : f32 to vector<8x128xf32>
    %7 = arith.maximumf %5, %6 : vector<8x128xf32>
    %c0_6 = arith.constant 0 : index
    %c0_7 = arith.constant 0 : index
    %8 = vector.load %arg4[%c0_6, %c0_7] : memref<128x3xf32, #tpu.memory_space<vmem>>, vector<128x3xf32>
    %cst_8 = arith.constant dense<0.000000e+00> : vector<8x3xf32>
    %9 = tpu.matmul %7, %8, %cst_8 {dimension_numbers = #tpu.dot_dimension_numbers<[1], [0], [0], [1], [0, 0, 1, 1], [], []>} : vector<8x128xf32>, vector<128x3xf32>, vector<8x3xf32> -> vector<8x3xf32>
    %c0_9 = arith.constant 0 : index
    %c0_10 = arith.constant 0 : index
    %10 = vector.load %arg5[%c0_9, %c0_10] : memref<1x3xf32, #tpu.memory_space<vmem>>, vector<1x3xf32>
    %11 = vector.broadcast %10 : vector<1x3xf32> to vector<8x3xf32>
    %12 = arith.addf %9, %11 : vector<8x3xf32>
    %c0_11 = arith.constant 0 : index
    %c0_12 = arith.constant 0 : index
    %13 = vector.load %arg6[%c0_11, %c0_12] : memref<8x3xf32, #tpu.memory_space<vmem>>, vector<8x3xf32>
    tpu.vector_store %arg6[%c0_11, %c0_12], %12 {strides = array<i32>} : memref<8x3xf32, #tpu.memory_space<vmem>>, vector<8x3xf32>,
    return
  }
  func.func @transform_0(%arg0: i32) -> (i32, i32) {
    %c0_i32 = arith.constant 0 : i32
    %c0_i32_0 = arith.constant 0 : i32
    return %arg0, %c0_i32 : i32, i32
  }
  func.func @transform_1(%arg0: i32) -> (i32, i32) {
    %c0_i32 = arith.constant 0 : i32
    %c0_i32_0 = arith.constant 0 : i32
    %c0_i32_1 = arith.constant 0 : i32
    return %c0_i32, %c0_i32_0 : i32, i32
  }
  func.func @transform_2(%arg0: i32) -> (i32, i32) {
    %c0_i32 = arith.constant 0 : i32
    %c0_i32_0 = arith.constant 0 : i32
    %c0_i32_1 = arith.constant 0 : i32
    return %c0_i32, %c0_i32_0 : i32, i32
  }
  func.func @transform_3(%arg0: i32) -> (i32, i32) {
    %c0_i32 = arith.constant 0 : i32
    %c0_i32_0 = arith.constant 0 : i32
    %c0_i32_1 = arith.constant 0 : i32
    return %c0_i32, %c0_i32_0 : i32, i32
  }
  func.func @transform_4(%arg0: i32) -> (i32, i32) {
    %c0_i32 = arith.constant 0 : i32
    %c0_i32_0 = arith.constant 0 : i32
    %c0_i32_1 = arith.constant 0 : i32
    return %c0_i32, %c0_i32_0 : i32, i32
  }
  func.func @transform_5(%arg0: i32) -> (i32, i32) {
    %c0_i32 = arith.constant 0 : i32
    %c0_i32_0 = arith.constant 0 : i32
    return %arg0, %c0_i32 : i32, i32
  }
}

</mosaic_0001>

<llo_original>
// kernel: tpu_custom_call.1
$region0: #{tpu_custom_call.1}
  #allocation0 [shape = 'u32[]', space=smem, size = 0x4, offset = 0x4, fixed_abs, tag = 'smem constant byte address 0x4 - core index']
  #allocation1 [shape = 'u32[144,128]{1,0:T(1,128)}', space=vmem, size = 0x12000, scoped, tag = 'internal scratch']
  %s0 = inlined_call_operand.vmem [shape: f32[2,11], index: 0, kind: input, shape index: {}]
  %s1 = inlined_call_operand.vmem [shape: f32[11,128], index: 1, kind: input, shape index: {}]
  %s2 = inlined_call_operand.vmem [shape: f32[1,128], index: 2, kind: input, shape index: {}]
  %s3 = inlined_call_operand.vmem [shape: f32[128,3], index: 3, kind: input, shape index: {}]
  %s4 = inlined_call_operand.vmem [shape: f32[1,3], index: 4, kind: input, shape index: {}]
  %s5 = inlined_call_operand.hbm [shape: f32[2,3], index: 5, kind: output, shape index: {}]
  %s6 = sld [smem:[#allocation0]]
  $region30: #{tpu_custom_call.1} parent=0
    _
  %s8 = ssub.s32 1, %s6
  %s9 = scalar_select 0, %s8, %s6
  $region1: #{tpu_custom_call.1} parent=0
    #allocation2 [shape = 'u8[4096]{0}', space=vmem, size = 0x1000, scoped, tag = 'output window, operand 0, single buffered']
    #allocation3 [shape = 's32[1]{0}', space=sflag, size = 0x4, scoped, tag = 'scoped memory for tpu_custom_call.1']
    %10 = vsyncpa [#allocation3], 0
    // Predicated region
    $region2: #{tpu_custom_call.1} parent=1 // pred_check
      _
    $region3: #{tpu_custom_call.1} parent=1 // pred_check_branch
      %12 = sbr.rel (0) target = $region5
    $region4: #{tpu_custom_call.1} parent=1 // pred_region
      _
    $region5: #{tpu_custom_call.1} parent=1 // pred_fallthru
      _
    // Predicated region
    $region6: #{tpu_custom_call.1} parent=1 // pred_check
      _
    $region7: #{tpu_custom_call.1} parent=1 // pred_check_branch
      %14 = sbr.rel (0) target = $region9
    $region8: #{tpu_custom_call.1} parent=1 // pred_region
      _
    $region9: #{tpu_custom_call.1} parent=1 // pred_fallthru
      _
    // Predicated region
    $region10: #{tpu_custom_call.1} parent=1 // pred_check
      _
    $region11: #{tpu_custom_call.1} parent=1 // pred_check_branch
      %16 = sbr.rel (0) target = $region13
    $region12: #{tpu_custom_call.1} parent=1 // pred_region
      _
    $region13: #{tpu_custom_call.1} parent=1 // pred_fallthru
      _
    // Predicated region
    $region14: #{tpu_custom_call.1} parent=1 // pred_check
      _
    $region15: #{tpu_custom_call.1} parent=1 // pred_check_branch
      %18 = sbr.rel (0) target = $region17
    $region16: #{tpu_custom_call.1} parent=1 // pred_region
      _
    $region17: #{tpu_custom_call.1} parent=1 // pred_fallthru
      _
    // Predicated region
    $region18: #{tpu_custom_call.1} parent=1 // pred_check
      _
    $region19: #{tpu_custom_call.1} parent=1 // pred_check_branch
      %20 = sbr.rel (0) target = $region21
    $region20: #{tpu_custom_call.1} parent=1 // pred_region
      _
    $region21: #{tpu_custom_call.1} parent=1 // pred_fallthru
      _
    %v21 = vld [vmem:[%s0] sm:$0xff]
    %v22 = vld [vmem:[%s1] sm:$0xff]
    %v23 = vld [vmem:[%s1 + $0x8] sm:$0x7]
    %v24 = vld [vmem:[%s2] sm:$0x1]
    %v26 = vlaneseq
    %v27 = vshrl.u32 %v26, 7
    %v28 = vsub.s32 0, %v27
    %v29 = vrot.slane %v24, %v28
    %vm31 = vcmask 89088
    %v33 = vsel %vm31, %v21, 0
    %vm35 = vcmask 1042432
    %v37 = vsel %vm35, %v23, 0
    %39 = vmatprep.subr.mxu0 0.0
    %40 = vmatpush1.msra.mxu0 0.0
    %41 = vmatprep.subr.mxu0 0.0
    %42 = vmatpush1.msra.mxu0 0.0
    %43 = vmatprep.subr.mxu0 0.0
    %44 = vmatpush1.msra.mxu0 0.0
    %45 = vmatprep.subr.mxu0 0.0
    %46 = vmatpush1.msra.mxu0 0.0
    %47 = vmatprep.subr.mxu0 0.0
    %48 = vmatpush1.msra.mxu0 0.0
    %49 = vmatprep.subr.mxu0 0.0
    %50 = vmatpush1.msra.mxu0 0.0
    %51 = vmatprep.subr.mxu0 0.0
    %52 = vmatpush1.msra.mxu0 0.0
    %53 = vmatprep.subr.mxu0 0.0
    %54 = vmatpush1.msra.mxu0 0.0
    %55 = vmatprep.subr.mxu0 0.0
    %56 = vmatpush1.msra.mxu0 0.0
    %57 = vmatprep.subr.mxu0 0.0
    %58 = vmatpush1.msra.mxu0 0.0
    %59 = vmatprep.subr.mxu0 0.0
    %60 = vmatpush1.msra.mxu0 0.0
    %61 = vmatprep.subr.mxu0 0.0
    %62 = vmatpush1.msra.mxu0 0.0
    %63 = vmatprep.subr.mxu0 0.0
    %64 = vmatpush1.msra.mxu0 0.0
    %65 = vmatprep.subr.mxu0 0.0
    %66 = vmatpush1.msra.mxu0 0.0
    %67 = vmatprep.subr.mxu0 0.0
    %68 = vmatpush1.msra.mxu0 %v37
    %69 = vmatprep.subr.mxu0 0.0
    %70 = vmatpush1.msra.mxu0 %v22
    %71 = vmatprep.subr.mxu0 0.0
    %72 = vmatpush2.msra.mxu0 0.0
    %73 = vmatprep.subr.mxu0 0.0
    %74 = vmatpush2.msra.mxu0 0.0
    %75 = vmatprep.subr.mxu0 0.0
    %76 = vmatpush2.msra.mxu0 0.0
    %77 = vmatprep.subr.mxu0 0.0
    %78 = vmatpush2.msra.mxu0 0.0
    %79 = vmatprep.subr.mxu0 0.0
    %80 = vmatpush2.msra.mxu0 0.0
    %81 = vmatprep.subr.mxu0 0.0
    %82 = vmatpush2.msra.mxu0 0.0
    %83 = vmatprep.subr.mxu0 0.0
    %84 = vmatpush2.msra.mxu0 0.0
    %85 = vmatprep.subr.mxu0 0.0
    %86 = vmatpush2.msra.mxu0 0.0
    %87 = vmatprep.subr.mxu0 0.0
    %88 = vmatpush2.msra.mxu0 0.0
    %89 = vmatprep.subr.mxu0 0.0
    %90 = vmatpush2.msra.mxu0 0.0
    %91 = vmatprep.subr.mxu0 0.0
    %92 = vmatpush2.msra.mxu0 0.0
    %93 = vmatprep.subr.mxu0 0.0
    %94 = vmatpush2.msra.mxu0 0.0
    %95 = vmatprep.subr.mxu0 0.0
    %96 = vmatpush2.msra.mxu0 0.0
    %97 = vmatprep.subr.mxu0 0.0
    %98 = vmatpush2.msra.mxu0 0.0
    %99 = vmatprep.subr.mxu0 0.0
    %100 = vmatpush2.msra.mxu0 0.0
    %101 = vmatprep.subr.mxu0 0.0
    %102 = vmatpush2.msra.mxu0 0.0
    %103 = vmatprep.mubr.f32.mxu0 0.0
    %104 = vmatmul.mubr.f32.gmra.mxu0 %v33
    %v105 = vpop.f32.mrf.mxu0
    %v106 = vadd.f32 %v29, %v105
    %v107 = vpop.f32.mrf.mxu0
    %108 = vdwg.mxu0
    %v109 = vmax.f32 %v106, 0.0
    %v110 = vld [vmem:[%s3] sm:$0xff]
    %v111 = vld [vmem:[%s3 + $0x8] sm:$0xff]
    %v112 = vld [vmem:[%s3 + $0x10] sm:$0xff]
    %v113 = vld [vmem:[%s3 + $0x18] sm:$0xff]
    %v114 = vld [vmem:[%s3 + $0x20] sm:$0xff]
    %v115 = vld [vmem:[%s3 + $0x28] sm:$0xff]
    %v116 = vld [vmem:[%s3 + $0x30] sm:$0xff]
    %v117 = vld [vmem:[%s3 + $0x38] sm:$0xff]
    %v118 = vld [vmem:[%s3 + $0x40] sm:$0xff]
    %v119 = vld [vmem:[%s3 + $0x48] sm:$0xff]
    %v120 = vld [vmem:[%s3 + $0x50] sm:$0xff]
    %v121 = vld [vmem:[%s3 + $0x58] sm:$0xff]
    %v122 = vld [vmem:[%s3 + $0x60] sm:$0xff]
    %v123 = vld [vmem:[%s3 + $0x68] sm:$0xff]
    %v124 = vld [vmem:[%s3 + $0x70] sm:$0xff]
    %v125 = vld [vmem:[%s3 + $0x78] sm:$0xff]
    %v126 = vld [vmem:[%s4] sm:$0x1]
    %v128 = vlaneseq
    %v129 = vshrl.u32 %v128, 7
    %v130 = vsub.s32 0, %v129
    %v131 = vrot.slane %v126, %v130
    %133 = vmatprep.subr.mxu0 0.0
    %134 = vmatpush1.msra.mxu0 %v125
    %135 = vmatprep.subr.mxu0 0.0
    %136 = vmatpush1.msra.mxu0 %v124
    %137 = vmatprep.subr.mxu0 0.0
    %138 = vmatpush1.msra.mxu0 %v123
    %139 = vmatprep.subr.mxu0 0.0
    %140 = vmatpush1.msra.mxu0 %v122
    %141 = vmatprep.subr.mxu0 0.0
    %142 = vmatpush1.msra.mxu0 %v121
    %143 = vmatprep.subr.mxu0 0.0
    %144 = vmatpush1.msra.mxu0 %v120
    %145 = vmatprep.subr.mxu0 0.0
    %146 = vmatpush1.msra.mxu0 %v119
    %147 = vmatprep.subr.mxu0 0.0
    %148 = vmatpush1.msra.mxu0 %v118
    %149 = vmatprep.subr.mxu0 0.0
    %150 = vmatpush1.msra.mxu0 %v117
    %151 = vmatprep.subr.mxu0 0.0
    %152 = vmatpush1.msra.mxu0 %v116
    %153 = vmatprep.subr.mxu0 0.0
    %154 = vmatpush1.msra.mxu0 %v115
    %155 = vmatprep.subr.mxu0 0.0
    %156 = vmatpush1.msra.mxu0 %v114
    %157 = vmatprep.subr.mxu0 0.0
    %158 = vmatpush1.msra.mxu0 %v113
    %159 = vmatprep.subr.mxu0 0.0
    %160 = vmatpush1.msra.mxu0 %v112
    %161 = vmatprep.subr.mxu0 0.0
    %162 = vmatpush1.msra.mxu0 %v111
    %163 = vmatprep.subr.mxu0 0.0
    %164 = vmatpush1.msra.mxu0 %v110
    %165 = vmatprep.subr.mxu0 0.0
    %166 = vmatpush2.msra.mxu0 0.0
    %167 = vmatprep.subr.mxu0 0.0
    %168 = vmatpush2.msra.mxu0 0.0
    %169 = vmatprep.subr.mxu0 0.0
    %170 = vmatpush2.msra.mxu0 0.0
    %171 = vmatprep.subr.mxu0 0.0
    %172 = vmatpush2.msra.mxu0 0.0
    %173 = vmatprep.subr.mxu0 0.0
    %174 = vmatpush2.msra.mxu0 0.0
    %175 = vmatprep.subr.mxu0 0.0
    %176 = vmatpush2.msra.mxu0 0.0
    %177 = vmatprep.subr.mxu0 0.0
    %178 = vmatpush2.msra.mxu0 0.0
    %179 = vmatprep.subr.mxu0 0.0
    %180 = vmatpush2.msra.mxu0 0.0
    %181 = vmatprep.subr.mxu0 0.0
    %182 = vmatpush2.msra.mxu0 0.0
    %183 = vmatprep.subr.mxu0 0.0
    %184 = vmatpush2.msra.mxu0 0.0
    %185 = vmatprep.subr.mxu0 0.0
    %186 = vmatpush2.msra.mxu0 0.0
    %187 = vmatprep.subr.mxu0 0.0
    %188 = vmatpush2.msra.mxu0 0.0
    %189 = vmatprep.subr.mxu0 0.0
    %190 = vmatpush2.msra.mxu0 0.0
    %191 = vmatprep.subr.mxu0 0.0
    %192 = vmatpush2.msra.mxu0 0.0
    %193 = vmatprep.subr.mxu0 0.0
    %194 = vmatpush2.msra.mxu0 0.0
    %195 = vmatprep.subr.mxu0 0.0
    %196 = vmatpush2.msra.mxu0 0.0
    %197 = vmatprep.mubr.f32.mxu0 0.0
    %198 = vmatmul.mubr.f32.gmra.mxu0 %v109
    %v199 = vpop.f32.mrf.mxu0
    %v200 = vadd.f32 %v131, %v199
    %v201 = vpop.f32.mrf.mxu0
    %202 = vdwg.mxu0
    %vm203 = vcmask 23552
    %204 = vst.msk [vmem:[#allocation2] sm:$0xff] %vm203, %v200
    // Predicated region
    $region22: #{tpu_custom_call.1} parent=1 // pred_check
      _
    $region23: #{tpu_custom_call.1} parent=1 // pred_check_branch
      %206 = sbr.rel (0) target = $region25
    $region24: #{tpu_custom_call.1} parent=1 // pred_region
      %s208 = ssub.s32 128, 32
      %209 = vsyncadd [#allocation3], %s208
      %s210 = sshll.u32 [#allocation2], 4
      %s211 = int_to_ptr.vmem [resolvable:$true] %s210
      %216 = dma.vmem_to_hbm [thread:$0]  %s211, 32, %s5, [#allocation3], 32, 32, 2
    $region25: #{tpu_custom_call.1} parent=1 // pred_fallthru
      _
    // Predicated region
    $region26: #{tpu_custom_call.1} parent=1 // pred_check
      _
    $region27: #{tpu_custom_call.1} parent=1 // pred_check_branch
      %218 = sbr.rel (0) target = $region29
    $region28: #{tpu_custom_call.1} parent=1 // pred_region
      %219 = dma.done [#allocation3], 128
    $region29: #{tpu_custom_call.1} parent=1 // pred_fallthru
      _
    %220 = vsyncpa [#allocation3], 1

</llo_original>
